<compile_context>
chip_gen: v5e
topology: v5e:2x2
jax: 0.10.0
libtpu: 0.0.40
codegen_flags: <defaults>
</compile_context>

<pallas_src>
import functools

import jax
import jax.numpy as jnp
from jax.experimental import pallas as pl
from jax.experimental.pallas import tpu as pltpu


def _channel_attention_kernel(x_ref, w1_ref, w2_ref, o_ref,
                              sum_acc, max_acc, *, hw, tl):
    # x_ref:   (1, C, tl)  current (batch n, spatial tile l) of x    (VMEM)
    # w1_ref:  (C, Hid)    fc1 weight, transposed                    (resident)
    # w2_ref:  (Hid, C)    fc2 weight, transposed                    (resident)
    # o_ref:   (1, 1, C)   sigmoid(channel attention) for batch n
    # sum_acc: (1, C) f32  running spatial sum  (scratch, reset per batch)
    # max_acc: (1, C) f32  running spatial max  (scratch, reset per batch)
    li = pl.program_id(1)
    last = pl.num_programs(1) - 1

    @pl.when(li == 0)
    def _init():
        sum_acc[...] = jnp.zeros_like(sum_acc)
        max_acc[...] = jnp.full_like(max_acc, -jnp.inf)

    xb = x_ref[...].astype(jnp.float32)                     # (1, C, tl)

    if hw % tl == 0:
        # Every tile is full: steady state is a pure sum / max.
        sum_acc[...] += jnp.sum(xb, axis=-1)
        max_acc[...] = jnp.maximum(max_acc[...], jnp.max(xb, axis=-1))
    else:
        # Only the last tile is ragged; its out-of-bounds lanes are
        # unspecified, so mask BOTH reductions there and keep the
        # steady-state path mask-free.
        @pl.when(li != last)
        def _steady():
            sum_acc[...] += jnp.sum(xb, axis=-1)
            max_acc[...] = jnp.maximum(max_acc[...], jnp.max(xb, axis=-1))

        @pl.when(li == last)
        def _edge():
            col = li * tl + jax.lax.broadcasted_iota(jnp.int32, (1, 1, tl), 2)
            valid = col < hw                                  # (1, 1, tl)
            sum_acc[...] += jnp.sum(jnp.where(valid, xb, 0.0), axis=-1)
            max_acc[...] = jnp.maximum(
                max_acc[...],
                jnp.max(jnp.where(valid, xb, -jnp.inf), axis=-1))

    @pl.when(li == last)
    def _finalize():
        avg = sum_acc[...] * jnp.float32(1.0 / hw)            # (1, C)
        mx = max_acc[...]                                     # (1, C)
        w1 = w1_ref[...]                                      # (C, Hid)
        w2 = w2_ref[...]                                      # (Hid, C)

        def mlp(v):  # shared fc1 -> ReLU -> fc2 (1x1 convs on pooled vectors)
            h = jnp.maximum(
                jnp.dot(v, w1, preferred_element_type=jnp.float32), 0.0)
            return jnp.dot(h, w2, preferred_element_type=jnp.float32)

        out = jax.nn.sigmoid(mlp(avg) + mlp(mx))              # (1, C)
        o_ref[...] = out.reshape(o_ref.shape).astype(o_ref.dtype)


def channel_attention(x, fc1_w, fc2_w, *, vmem_budget_bytes=8 * 1024 * 1024):
    """ChannelAttention forward.

    x:      (N, C, H, W) NCHW (f32 or bf16; accumulation is always f32)
    fc1_w:  (C//ratio, C, 1, 1)  (Conv2d 1x1, bias=False)
    fc2_w:  (C, C//ratio, 1, 1)  (Conv2d 1x1, bias=False)
    returns (N, C, 1, 1) float32 attention weights in (0, 1)
    """
    N, C, H, W = x.shape
    hidden = fc1_w.shape[0]
    HW = H * W
    itemsize = x.dtype.itemsize

    x2 = x.reshape(N, C, HW)           # pure reshape, no HBM copy / padding

    # Lane-dense spatial tile: multiple of 128, sized from a VMEM byte budget
    # (block is (1, C, tl), double-buffered), capped at 8192.
    tl_budget = vmem_budget_bytes // (2 * C * itemsize)
    tl_cap = max(128, (min(tl_budget, 8192) // 128) * 128)
    hw_128 = pl.cdiv(HW, 128) * 128
    tl = min(tl_cap, hw_128)
    grid = (N, pl.cdiv(HW, tl))        # ragged last tile handled in-kernel

    w1t = fc1_w.reshape(hidden, C).T.astype(jnp.float32)   # (C, hidden)
    w2t = fc2_w.reshape(C, hidden).T.astype(jnp.float32)   # (hidden, C)

    kernel = functools.partial(_channel_attention_kernel, hw=HW, tl=tl)

    out = pl.pallas_call(
        kernel,
        out_shape=jax.ShapeDtypeStruct((N, 1, C), jnp.float32),
        grid_spec=pltpu.PrefetchScalarGridSpec(
            num_scalar_prefetch=0,
            grid=grid,
            in_specs=[
                pl.BlockSpec((1, C, tl), lambda n, l: (n, 0, l)),   # streamed x
                pl.BlockSpec((C, hidden), lambda n, l: (0, 0)),     # resident fc1^T
                pl.BlockSpec((hidden, C), lambda n, l: (0, 0)),     # resident fc2^T
            ],
            out_specs=pl.BlockSpec((1, 1, C), lambda n, l: (n, 0, 0)),
            scratch_shapes=[
                pltpu.VMEM((1, C), jnp.float32),   # spatial sum accumulator
                pltpu.VMEM((1, C), jnp.float32),   # spatial max accumulator
            ],
        ),
        compiler_params=pltpu.CompilerParams(
            # batch axis -> megacore-parallel (v7x); spatial axis -> reduction
            dimension_semantics=("parallel", "arbitrary"),
        ),
        cost_estimate=pl.CostEstimate(
            flops=2 * N * C * HW + 8 * N * C * hidden,
            transcendentals=N * C,
            bytes_accessed=(x2.size * itemsize
                            + (w1t.size + w2t.size) * 4 + N * C * 4),
        ),
    )(x2, w1t, w2t)

    return out.reshape(N, C, 1, 1)


def _reference(x, fc1_w, fc2_w):
    N, C, H, W = x.shape
    hidden = fc1_w.shape[0]
    w1 = fc1_w.reshape(hidden, C)
    w2 = fc2_w.reshape(C, hidden)
    xf = x.astype(jnp.float32)
    avg = xf.mean(axis=(2, 3))                 # AdaptiveAvgPool2d(1)
    mx = xf.max(axis=(2, 3))                   # AdaptiveMaxPool2d(1)

    def mlp(v):
        return jnp.maximum(v @ w1.T, 0.0) @ w2.T

    out = jax.nn.sigmoid(mlp(avg) + mlp(mx))
    return out.reshape(N, C, 1, 1)


if __name__ == "__main__":
    key = jax.random.PRNGKey(0)
    k_x, k_w1, k_w2 = jax.random.split(key, 3)

    # The module hard-codes fc1 = Conv2d(128, in_planes//ratio, 1), so the
    # forward is only valid for in_planes == 128.
    N, C, H, W = 2, 128, 16, 16
    ratio = 16
    hidden = C // ratio

    x = jax.random.normal(k_x, (N, C, H, W), dtype=jnp.float32)
    fc1_w = jax.random.normal(k_w1, (hidden, C, 1, 1), dtype=jnp.float32) * 0.1
    fc2_w = jax.random.normal(k_w2, (C, hidden, 1, 1), dtype=jnp.float32) * 0.1

    fwd = jax.jit(channel_attention)
    y = fwd(x, fc1_w, fc2_w)
    jax.block_until_ready(y)

    y_ref = _reference(x, fc1_w, fc2_w)
    assert y.shape == (N, C, 1, 1), y.shape
    assert jnp.allclose(y, y_ref, atol=1e-3, rtol=1e-3), float(
        jnp.max(jnp.abs(y - y_ref))
    )

    print("KERNEL_OK")
</pallas_src>

<mosaic_0001>
module attributes {stable_mosaic.version = 11 : i64} {
  func.func @_channel_attention_kernel(%arg0: i32, %arg1: i32, %arg2: memref<1x128x256xf32, #tpu.memory_space<vmem>>, %arg3: memref<128x8xf32, #tpu.memory_space<vmem>>, %arg4: memref<8x128xf32, #tpu.memory_space<vmem>>, %arg5: memref<1x1x128xf32, #tpu.memory_space<vmem>>, %arg6: memref<1x128xf32, #tpu.memory_space<vmem>>, %arg7: memref<1x128xf32, #tpu.memory_space<vmem>>) attributes {dimension_semantics = [#tpu.dimension_semantics<parallel>, #tpu.dimension_semantics<arbitrary>], iteration_bounds = array<i64: 2, 1>, scalar_prefetch = 0 : i64, scratch_operands = 2 : i64, tpu.core_type = #tpu.core_type<tc>, window_params = [{transform_indices = @transform_0, window_bounds = array<i64: 1, 128, 256>}, {pipeline_mode = #tpu.pipeline_mode<synchronous>, transform_indices = @transform_1, window_bounds = array<i64: 128, 8>}, {pipeline_mode = #tpu.pipeline_mode<synchronous>, transform_indices = @transform_2, window_bounds = array<i64: 8, 128>}, {transform_indices = @transform_3, window_bounds = array<i64: 1, 1, 128>}]} {
    %c0_i32 = arith.constant 0 : i32
    %0 = arith.cmpi eq, %arg1, %c0_i32 : i32
    %1 = arith.extui %0 : i1 to i32
    %c0_i32_0 = arith.constant 0 : i32
    %2 = arith.cmpi ne, %1, %c0_i32_0 : i32
    scf.if %2 {
      %cst_14 = arith.constant 0.000000e+00 : f32
      %15 = vector.broadcast %cst_14 : f32 to vector<1x128xf32>
      %c0_15 = arith.constant 0 : index
      %c0_16 = arith.constant 0 : index
      %16 = vector.load %arg6[%c0_15, %c0_16] : memref<1x128xf32, #tpu.memory_space<vmem>>, vector<1x128xf32>
      tpu.vector_store %arg6[%c0_15, %c0_16], %15 {strides = array<i32>} : memref<1x128xf32, #tpu.memory_space<vmem>>, vector<1x128xf32>,
      %cst_17 = arith.constant 0xFF800000 : f32
      %17 = vector.broadcast %cst_17 : f32 to vector<1x128xf32>
      %c0_18 = arith.constant 0 : index
      %c0_19 = arith.constant 0 : index
      %18 = vector.load %arg7[%c0_18, %c0_19] : memref<1x128xf32, #tpu.memory_space<vmem>>, vector<1x128xf32>
      tpu.vector_store %arg7[%c0_18, %c0_19], %17 {strides = array<i32>} : memref<1x128xf32, #tpu.memory_space<vmem>>, vector<1x128xf32>,
    } else {
    }
    %c0 = arith.constant 0 : index
    %c0_1 = arith.constant 0 : index
    %c0_2 = arith.constant 0 : index
    %3 = vector.load %arg2[%c0, %c0_1, %c0_2] : memref<1x128x256xf32, #tpu.memory_space<vmem>>, vector<1x128x256xf32>
    %c0_3 = arith.constant 0 : index
    %c0_4 = arith.constant 0 : index
    %4 = vector.load %arg6[%c0_3, %c0_4] : memref<1x128xf32, #tpu.memory_space<vmem>>, vector<1x128xf32>
    %cst = arith.constant dense<0.000000e+00> : vector<1x128xf32>
    %5 = vector.multi_reduction <add>, %3, %cst [2] : vector<1x128x256xf32> to vector<1x128xf32>
    %6 = arith.addf %4, %5 : vector<1x128xf32>
    %c0_5 = arith.constant 0 : index
    %c0_6 = arith.constant 0 : index
    %7 = vector.load %arg6[%c0_5, %c0_6] : memref<1x128xf32, #tpu.memory_space<vmem>>, vector<1x128xf32>
    tpu.vector_store %arg6[%c0_5, %c0_6], %6 {strides = array<i32>} : memref<1x128xf32, #tpu.memory_space<vmem>>, vector<1x128xf32>,
    %c0_7 = arith.constant 0 : index
    %c0_8 = arith.constant 0 : index
    %8 = vector.load %arg7[%c0_7, %c0_8] : memref<1x128xf32, #tpu.memory_space<vmem>>, vector<1x128xf32>
    %cst_9 = arith.constant dense<0xFF800000> : vector<1x128xf32>
    %9 = vector.multi_reduction <maximumf>, %3, %cst_9 [2] : vector<1x128x256xf32> to vector<1x128xf32>
    %10 = arith.maximumf %8, %9 : vector<1x128xf32>
    %c0_10 = arith.constant 0 : index
    %c0_11 = arith.constant 0 : index
    %11 = vector.load %arg7[%c0_10, %c0_11] : memref<1x128xf32, #tpu.memory_space<vmem>>, vector<1x128xf32>
    tpu.vector_store %arg7[%c0_10, %c0_11], %10 {strides = array<i32>} : memref<1x128xf32, #tpu.memory_space<vmem>>, vector<1x128xf32>,
    %c0_i32_12 = arith.constant 0 : i32
    %12 = arith.cmpi eq, %arg1, %c0_i32_12 : i32
    %13 = arith.extui %12 : i1 to i32
    %c0_i32_13 = arith.constant 0 : i32
    %14 = arith.cmpi ne, %13, %c0_i32_13 : i32
    scf.if %14 {
      %c0_14 = arith.constant 0 : index
      %c0_15 = arith.constant 0 : index
      %15 = vector.load %arg6[%c0_14, %c0_15] : memref<1x128xf32, #tpu.memory_space<vmem>>, vector<1x128xf32>
      %cst_16 = arith.constant 3.906250e-03 : f32
      %16 = vector.broadcast %cst_16 : f32 to vector<1x128xf32>
      %17 = arith.mulf %15, %16 : vector<1x128xf32>
      %c0_17 = arith.constant 0 : index
      %c0_18 = arith.constant 0 : index
      %18 = vector.load %arg7[%c0_17, %c0_18] : memref<1x128xf32, #tpu.memory_space<vmem>>, vector<1x128xf32>
      %c0_19 = arith.constant 0 : index
      %c0_20 = arith.constant 0 : index
      %19 = vector.load %arg3[%c0_19, %c0_20] : memref<128x8xf32, #tpu.memory_space<vmem>>, vector<128x8xf32>
      %c0_21 = arith.constant 0 : index
      %c0_22 = arith.constant 0 : index
      %20 = vector.load %arg4[%c0_21, %c0_22] : memref<8x128xf32, #tpu.memory_space<vmem>>, vector<8x128xf32>
      %cst_23 = arith.constant dense<0.000000e+00> : vector<1x8xf32>
      %21 = tpu.matmul %17, %19, %cst_23 {dimension_numbers = #tpu.dot_dimension_numbers<[1], [0], [0], [1], [0, 0, 1, 1], [], []>} : vector<1x128xf32>, vector<128x8xf32>, vector<1x8xf32> -> vector<1x8xf32>
      %cst_24 = arith.constant 0.000000e+00 : f32
      %22 = vector.broadcast %cst_24 : f32 to vector<1x8xf32>
      %23 = arith.maximumf %21, %22 : vector<1x8xf32>
      %cst_25 = arith.constant dense<0.000000e+00> : vector<1x128xf32>
      %24 = tpu.matmul %23, %20, %cst_25 {dimension_numbers = #tpu.dot_dimension_numbers<[1], [0], [0], [1], [0, 0, 1, 1], [], []>} : vector<1x8xf32>, vector<8x128xf32>, vector<1x128xf32> -> vector<1x128xf32>
      %cst_26 = arith.constant dense<0.000000e+00> : vector<1x8xf32>
      %25 = tpu.matmul %18, %19, %cst_26 {dimension_numbers = #tpu.dot_dimension_numbers<[1], [0], [0], [1], [0, 0, 1, 1], [], []>} : vector<1x128xf32>, vector<128x8xf32>, vector<1x8xf32> -> vector<1x8xf32>
      %cst_27 = arith.constant 0.000000e+00 : f32
      %26 = vector.broadcast %cst_27 : f32 to vector<1x8xf32>
      %27 = arith.maximumf %25, %26 : vector<1x8xf32>
      %cst_28 = arith.constant dense<0.000000e+00> : vector<1x128xf32>
      %28 = tpu.matmul %27, %20, %cst_28 {dimension_numbers = #tpu.dot_dimension_numbers<[1], [0], [0], [1], [0, 0, 1, 1], [], []>} : vector<1x8xf32>, vector<8x128xf32>, vector<1x128xf32> -> vector<1x128xf32>
      %29 = arith.addf %24, %28 : vector<1x128xf32>
      %30 = arith.negf %29 : vector<1x128xf32>
      %31 = math.exp %30 : vector<1x128xf32>
      %cst_29 = arith.constant 1.000000e+00 : f32
      %32 = vector.broadcast %cst_29 : f32 to vector<1x128xf32>
      %33 = arith.addf %32, %31 : vector<1x128xf32>
      %34 = arith.divf %32, %33 : vector<1x128xf32>
      %35 = vector.shape_cast %34 : vector<1x128xf32> to vector<1x1x128xf32>
      %c0_30 = arith.constant 0 : index
      %c0_31 = arith.constant 0 : index
      %c0_32 = arith.constant 0 : index
      %36 = vector.load %arg5[%c0_30, %c0_31, %c0_32] : memref<1x1x128xf32, #tpu.memory_space<vmem>>, vector<1x1x128xf32>
      tpu.vector_store %arg5[%c0_30, %c0_31, %c0_32], %35 {strides = array<i32>} : memref<1x1x128xf32, #tpu.memory_space<vmem>>, vector<1x1x128xf32>,
    } else {
    }
    return
  }
  func.func @transform_0(%arg0: i32, %arg1: i32) -> (i32, i32, i32) {
    %c0_i32 = arith.constant 0 : i32
    %c0_i32_0 = arith.constant 0 : i32
    return %arg0, %c0_i32, %arg1 : i32, i32, i32
  }
  func.func @transform_1(%arg0: i32, %arg1: i32) -> (i32, i32) {
    %c0_i32 = arith.constant 0 : i32
    %c0_i32_0 = arith.constant 0 : i32
    %c0_i32_1 = arith.constant 0 : i32
    return %c0_i32, %c0_i32_0 : i32, i32
  }
  func.func @transform_2(%arg0: i32, %arg1: i32) -> (i32, i32) {
    %c0_i32 = arith.constant 0 : i32
    %c0_i32_0 = arith.constant 0 : i32
    %c0_i32_1 = arith.constant 0 : i32
    return %c0_i32, %c0_i32_0 : i32, i32
  }
  func.func @transform_3(%arg0: i32, %arg1: i32) -> (i32, i32, i32) {
    %c0_i32 = arith.constant 0 : i32
    %c0_i32_0 = arith.constant 0 : i32
    %c0_i32_1 = arith.constant 0 : i32
    return %arg0, %c0_i32, %c0_i32_0 : i32, i32, i32
  }
}

</mosaic_0001>

<llo_original>
// kernel: channel_attention.1
$region0: #{channel_attention.1}
  #allocation0 [shape = 'u32[]', space=smem, size = 0x4, offset = 0x4, fixed_abs, tag = 'smem constant byte address 0x4 - core index']
  #allocation1 [shape = 'u32[72,128]{1,0:T(1,128)}', space=vmem, size = 0x9000, scoped, tag = 'internal scratch']
  #allocation2 [shape = 'f32[1,128]{1,0:T(1,128)}', space=vmem, size = 0x200, scoped, tag = 'scratch operand']
  #allocation3 [shape = 'f32[1,128]{1,0:T(1,128)}', space=vmem, size = 0x200, scoped, tag = 'scratch operand']
  %s0 = inlined_call_operand.vmem [shape: f32[2,128,256], index: 0, kind: input, shape index: {}]
  %s1 = inlined_call_operand.vmem [shape: f32[128,8], index: 1, kind: input, shape index: {}]
  %s2 = inlined_call_operand.vmem [shape: f32[8,128], index: 2, kind: input, shape index: {}]
  %s3 = inlined_call_operand.hbm [shape: f32[2,1,128], index: 3, kind: output, shape index: {}]
  %s4 = sld [smem:[#allocation0]]
  $region53: #{channel_attention.1} parent=0
    _
  %s6 = ssub.s32 1, %s4
  %s7 = scalar_select 0, %s6, %s4
  $region1: #{channel_attention.1} parent=0
    #allocation4 [shape = 'u8[1024]{0}', space=vmem, size = 0x400, scoped, tag = 'output window, operand 0']
    #allocation5 [shape = 's32[2]{0}', space=sflag, size = 0x8, scoped, tag = 'scoped memory for channel_attention.1']
    %8 = vsyncpa [#allocation5], 0
    %s9 = scalar_lea.sflag [#allocation5], 1
    %10 = vsyncpa %s9, 0
    loop: start=0, step=1, limit=4
    $region2: #{channel_attention.1} parent=1 // loop_pre_header
      _
    $region3: #{channel_attention.1} parent=1 // loop_header
      %s12 = sphi 0, %s16
      %p13 = scmp.ge.s32.totalorder %s12, 4
      %s19 = sphi 0, %s31
      %s20 = sphi 0, %s27
      %s21 = sphi 0, %s19
      %s22 = sphi 0, %s20
      %s23 = sphi 0, %s21
      %s24 = sphi 0, %s22
      %s36 = sphi 0, %s38
      %s39 = sphi 0, %s36
      %s40 = sphi 0, %s39
      %s56 = sphi 0, %s40
      %s60 = sphi 0, %s60
      %s62 = sphi 0, %s60
      %s63 = sphi 0, %s62
      %s77 = sphi 0, %s63
      %s81 = sphi 0, %s81
      %s83 = sphi 0, %s81
      %s84 = sphi 0, %s83
      %s98 = sphi 0, %s84
      %s104 = sphi 0, %s106
      %s107 = sphi 0, %s104
      %s108 = sphi 0, %s107
      %s124 = sphi 0, %s108
    $region4: #{channel_attention.1} parent=1 // loop_header_branch
      %15 = sbr.rel (%p13) target = $region8
    $region5: #{channel_attention.1} parent=1 // loop_body
      %s17 = ssub.s32 %s12, 1
      %s18 = ssub.s32 %s12, 2
      %s25 = sadd.s32 1, %s20
      %p26 = scmp.ge.s32.totalorder %s25, 1
      %s27 = scalar_select %p26, 0, %s25
      %s28 = sadd.s32 1, %s19
      %s29 = scalar_select %p26, %s28, %s19
      %p30 = scmp.ge.s32.totalorder %s29, 2
      %s31 = scalar_select %p30, 0, %s29
      %s32 = ssub.s32 %s19, %s31
      %s33 = ssub.s32 %s20, %s27
      %s34 = sor.u32 %s32, %s33
      %p35 = scmp.eq.s32.totalorder %s34, 0
      %s37 = sadd.s32 %s36, 1
      %s38 = scalar_select %p35, %s36, %s37
      %p41 = pneg %p35
      %p42 = scmp.eq.s32.totalorder %s12, 1
      %p43 = por %p41, %p42
      %p44 = scmp.ne.s32.totalorder %s36, %s39
      %p45 = scmp.eq.s32.totalorder %s12, 0
      %p46 = por %p44, %p45
      %p47 = scmp.ne.s32.totalorder %s36, %s39
      %p48 = scmp.eq.s32.totalorder %s17, 1
      %p49 = por %p47, %p48
      %p50 = scmp.ne.s32.totalorder %s39, %s40
      %p51 = scmp.eq.s32.totalorder %s17, 0
      %p52 = por %p50, %p51
      %p53 = scmp.ne.s32.totalorder %s39, %s40
      %p54 = scmp.eq.s32.totalorder %s18, 1
      %p55 = por %p53, %p54
      %p57 = scmp.ne.s32.totalorder %s40, %s56
      %p58 = scmp.eq.s32.totalorder %s18, 0
      %p59 = por %p57, %p58
      %s61 = sadd.s32 %s60, 1
      %p64 = scmp.eq.s32.totalorder %s12, 1
      %p65 = scmp.ne.s32.totalorder %s60, %s62
      %p66 = scmp.eq.s32.totalorder %s12, 0
      %p67 = por %p65, %p66
      %p68 = scmp.ne.s32.totalorder %s60, %s62
      %p69 = scmp.eq.s32.totalorder %s17, 1
      %p70 = por %p68, %p69
      %p71 = scmp.ne.s32.totalorder %s62, %s63
      %p72 = scmp.eq.s32.totalorder %s17, 0
      %p73 = por %p71, %p72
      %p74 = scmp.ne.s32.totalorder %s62, %s63
      %p75 = scmp.eq.s32.totalorder %s18, 1
      %p76 = por %p74, %p75
      %p78 = scmp.ne.s32.totalorder %s63, %s77
      %p79 = scmp.eq.s32.totalorder %s18, 0
      %p80 = por %p78, %p79
      %s82 = sadd.s32 %s81, 1
      %p85 = scmp.eq.s32.totalorder %s12, 1
      %p86 = scmp.ne.s32.totalorder %s81, %s83
      %p87 = scmp.eq.s32.totalorder %s12, 0
      %p88 = por %p86, %p87
      %p89 = scmp.ne.s32.totalorder %s81, %s83
      %p90 = scmp.eq.s32.totalorder %s17, 1
      %p91 = por %p89, %p90
      %p92 = scmp.ne.s32.totalorder %s83, %s84
      %p93 = scmp.eq.s32.totalorder %s17, 0
      %p94 = por %p92, %p93
      %p95 = scmp.ne.s32.totalorder %s83, %s84
      %p96 = scmp.eq.s32.totalorder %s18, 1
      %p97 = por %p95, %p96
      %p99 = scmp.ne.s32.totalorder %s84, %s98
      %p100 = scmp.eq.s32.totalorder %s18, 0
      %p101 = por %p99, %p100
      %s102 = ssub.s32 %s19, %s31
      %p103 = scmp.eq.s32.totalorder %s102, 0
      %s105 = sadd.s32 %s104, 1
      %s106 = scalar_select %p103, %s104, %s105
      %p109 = pneg %p103
      %p110 = scmp.eq.s32.totalorder %s12, 1
      %p111 = por %p109, %p110
      %p112 = scmp.ne.s32.totalorder %s104, %s107
      %p113 = scmp.eq.s32.totalorder %s12, 0
      %p114 = por %p112, %p113
      %p115 = scmp.ne.s32.totalorder %s104, %s107
      %p116 = scmp.eq.s32.totalorder %s17, 1
      %p117 = por %p115, %p116
      %p118 = scmp.ne.s32.totalorder %s107, %s108
      %p119 = scmp.eq.s32.totalorder %s17, 0
      %p120 = por %p118, %p119
      %p121 = scmp.ne.s32.totalorder %s107, %s108
      %p122 = scmp.eq.s32.totalorder %s18, 1
      %p123 = por %p121, %p122
      %p125 = scmp.ne.s32.totalorder %s108, %s124
      %p126 = scmp.eq.s32.totalorder %s18, 0
      %p127 = por %p125, %p126
      %p128 = scmp.le.s32.totalorder 1, %s12
      %p129 = scmp.lt.s32.totalorder %s12, 3
      %p130 = pnand %p128, %p129
      %p131 = pneg %p130
      // Predicated region
      $region9: #{channel_attention.1} parent=5 // pred_check
        _
      $region10: #{channel_attention.1} parent=5 // pred_check_branch
        %133 = sbr.rel (%p130) target = $region12
      $region11: #{channel_attention.1} parent=5 // pred_region
        %s134 = ssub.s32 %s12, 1
        // Predicated region
        $region13: #{channel_attention.1} parent=11 // pred_check
          %p135 = pneg %p73
        $region14: #{channel_attention.1} parent=11 // pred_check_branch
          %137 = sbr.rel (%p135) target = $region16
        $region15: #{channel_attention.1} parent=11 // pred_region
          _
        $region16: #{channel_attention.1} parent=11 // pred_fallthru
          _
        // Predicated region
        $region17: #{channel_attention.1} parent=11 // pred_check
          %p138 = pneg %p94
        $region18: #{channel_attention.1} parent=11 // pred_check_branch
          %140 = sbr.rel (%p138) target = $region20
        $region19: #{channel_attention.1} parent=11 // pred_region
          _
        $region20: #{channel_attention.1} parent=11 // pred_fallthru
          _
      $region12: #{channel_attention.1} parent=5 // pred_fallthru
        _
      %p141 = scmp.lt.s32.totalorder %s12, 2
      // Predicated region
      $region21: #{channel_attention.1} parent=5 // pred_check
        %p142 = pneg %p141
      $region22: #{channel_attention.1} parent=5 // pred_check_branch
        %144 = sbr.rel (%p142) target = $region24
      $region23: #{channel_attention.1} parent=5 // pred_region
        // Predicated region
        $region25: #{channel_attention.1} parent=23 // pred_check
          %p145 = pneg %p46
        $region26: #{channel_attention.1} parent=23 // pred_check_branch
          %147 = sbr.rel (%p145) target = $region28
        $region27: #{channel_attention.1} parent=23 // pred_region
          %s148 = smul.u32 2, %s20
          %p149 = scmp.lt.s32.totalorder %s19, 1
          %s150 = scalar_select %p149, %s19, 1
          %p151 = scmp.lt.s32.totalorder %s148, 1
          %s152 = scalar_select %p151, %s148, 1
          %s153 = smul.addr %s150, 32
          %s154 = sadd.s32 %s152, %s153
          %s155 = smul.addr %s154, 8
          %s156 = scalar_lea.vmem %s0, %s155
          %s157 = smul.u32 2, %s20
        $region28: #{channel_attention.1} parent=23 // pred_fallthru
          _
      $region24: #{channel_attention.1} parent=5 // pred_fallthru
        _
      %p158 = scmp.le.s32.totalorder 1, %s12
      %p159 = scmp.lt.s32.totalorder %s12, 3
      %p160 = pnand %p158, %p159
      %p161 = pneg %p160
      // Predicated region
      $region29: #{channel_attention.1} parent=5 // pred_check
        _
      $region30: #{channel_attention.1} parent=5 // pred_check_branch
        %163 = sbr.rel (%p160) target = $region32
      $region31: #{channel_attention.1} parent=5 // pred_region
        %s164 = ssub.s32 %s12, 1
        %s165 = smul.u32 2, %s22
        %p166 = scmp.lt.s32.totalorder %s21, 1
        %s167 = scalar_select %p166, %s21, 1
        %p168 = scmp.lt.s32.totalorder %s165, 1
        %s169 = scalar_select %p168, %s165, 1
        %s170 = smul.addr %s167, 32
        %s171 = sadd.s32 %s169, %s170
        %s172 = smul.addr %s171, 8
        %s173 = scalar_lea.vmem %s0, %s172
        %p174 = pneg %p52
        %p175 = pneg %p49
        %p176 = pneg %p73
        %p177 = pneg %p70
        %p178 = pneg %p94
        %p179 = pneg %p91
        %p180 = pneg %p120
        %p181 = pneg %p117
        %s182 = sand.u32 %s107, 1
        %s183 = scalar_lea.sflag [#allocation5], %s182
        %s184 = sand.u32 %s107, 1
        %s185 = scalar_lea.vmem [#allocation4], %s184
        %s186 = smul.u32 2, %s22
        %p187 = scmp.lt.s32.totalorder %s21, 1
        %s188 = scalar_select %p187, %s21, 1
        %p189 = scmp.lt.s32.totalorder %s186, 1
        %s190 = scalar_select %p189, %s186, 1
        %s191 = smul.addr %s188, 32
        %s192 = sadd.s32 %s190, %s191
        %s193 = smul.addr %s192, 8
        %s194 = scalar_lea.vmem %s0, %s193
        %s195 = smul.u32 2, %s22
        %p196 = scmp.eq.s32.totalorder %s22, 0
        // Predicated region
        $region33: #{channel_attention.1} parent=31 // pred_check
          %p197 = pneg %p196
        $region34: #{channel_attention.1} parent=31 // pred_check_branch
          %199 = sbr.rel (%p197) target = $region36
        $region35: #{channel_attention.1} parent=31 // pred_region
          %200 = vst [vmem:[#allocation2] sm:$0x1] 0.0
          %201 = vst [vmem:[#allocation3] sm:$0x1] -inf
        $region36: #{channel_attention.1} parent=31 // pred_fallthru
          _
        %v202 = vld [vmem:[%s194] sm:$0xff]
        %v203 = vld [vmem:[%s194 + $0x8] sm:$0xff]
        %v204 = vld [vmem:[%s194 + $0x10] sm:$0xff]
        %v205 = vld [vmem:[%s194 + $0x18] sm:$0xff]
        %v206 = vld [vmem:[%s194 + $0x20] sm:$0xff]
        %v207 = vld [vmem:[%s194 + $0x28] sm:$0xff]
        %v208 = vld [vmem:[%s194 + $0x30] sm:$0xff]
        %v209 = vld [vmem:[%s194 + $0x38] sm:$0xff]
        %v210 = vld [vmem:[%s194 + $0x40] sm:$0xff]
        %v211 = vld [vmem:[%s194 + $0x48] sm:$0xff]
        %v212 = vld [vmem:[%s194 + $0x50] sm:$0xff]
        %v213 = vld [vmem:[%s194 + $0x58] sm:$0xff]
        %v214 = vld [vmem:[%s194 + $0x60] sm:$0xff]
        %v215 = vld [vmem:[%s194 + $0x68] sm:$0xff]
        %v216 = vld [vmem:[%s194 + $0x70] sm:$0xff]
        %v217 = vld [vmem:[%s194 + $0x78] sm:$0xff]
        %v218 = vld [vmem:[%s194 + $0x80] sm:$0xff]
        %v219 = vld [vmem:[%s194 + $0x88] sm:$0xff]
        %v220 = vld [vmem:[%s194 + $0x90] sm:$0xff]
        %v221 = vld [vmem:[%s194 + $0x98] sm:$0xff]
        %v222 = vld [vmem:[%s194 + $0xa0] sm:$0xff]
        %v223 = vld [vmem:[%s194 + $0xa8] sm:$0xff]
        %v224 = vld [vmem:[%s194 + $0xb0] sm:$0xff]
        %v225 = vld [vmem:[%s194 + $0xb8] sm:$0xff]
        %v226 = vld [vmem:[%s194 + $0xc0] sm:$0xff]
        %v227 = vld [vmem:[%s194 + $0xc8] sm:$0xff]
        %v228 = vld [vmem:[%s194 + $0xd0] sm:$0xff]
        %v229 = vld [vmem:[%s194 + $0xd8] sm:$0xff]
        %v230 = vld [vmem:[%s194 + $0xe0] sm:$0xff]
        %v231 = vld [vmem:[%s194 + $0xe8] sm:$0xff]
        %v232 = vld [vmem:[%s194 + $0xf0] sm:$0xff]
        %v233 = vld [vmem:[%s194 + $0xf8] sm:$0xff]
        %v234 = vld [vmem:[#allocation2] sm:$0x1]
        %v235 = vadd.f32 %v202, %v203
        %236 = vadd.xlane.f32.xlu0 %v235
        %v237 = vpop.xlane.xlu0 %236
        %v238 = vadd.f32 %v204, %v205
        %239 = vadd.xlane.f32.xlu0 %v238
        %v240 = vpop.xlane.xlu0 %239
        %v241 = vadd.f32 %v206, %v207
        %242 = vadd.xlane.f32.xlu0 %v241
        %v243 = vpop.xlane.xlu0 %242
        %v244 = vadd.f32 %v208, %v209
        %245 = vadd.xlane.f32.xlu0 %v244
        %v246 = vpop.xlane.xlu0 %245
        %v247 = vadd.f32 %v210, %v211
        %248 = vadd.xlane.f32.xlu0 %v247
        %v249 = vpop.xlane.xlu0 %248
        %v250 = vadd.f32 %v212, %v213
        %251 = vadd.xlane.f32.xlu0 %v250
        %v252 = vpop.xlane.xlu0 %251
        %v253 = vadd.f32 %v214, %v215
        %254 = vadd.xlane.f32.xlu0 %v253
        %v255 = vpop.xlane.xlu0 %254
        %v256 = vadd.f32 %v216, %v217
        %257 = vadd.xlane.f32.xlu0 %v256
        %v258 = vpop.xlane.xlu0 %257
        %v259 = vadd.f32 %v218, %v219
        %260 = vadd.xlane.f32.xlu0 %v259
        %v261 = vpop.xlane.xlu0 %260
        %v262 = vadd.f32 %v220, %v221
        %263 = vadd.xlane.f32.xlu0 %v262
        %v264 = vpop.xlane.xlu0 %263
        %v265 = vadd.f32 %v222, %v223
        %266 = vadd.xlane.f32.xlu0 %v265
        %v267 = vpop.xlane.xlu0 %266
        %v268 = vadd.f32 %v224, %v225
        %269 = vadd.xlane.f32.xlu0 %v268
        %v270 = vpop.xlane.xlu0 %269
        %v271 = vadd.f32 %v226, %v227
        %272 = vadd.xlane.f32.xlu0 %v271
        %v273 = vpop.xlane.xlu0 %272
        %v274 = vadd.f32 %v228, %v229
        %275 = vadd.xlane.f32.xlu0 %v274
        %v276 = vpop.xlane.xlu0 %275
        %v277 = vadd.f32 %v230, %v231
        %278 = vadd.xlane.f32.xlu0 %v277
        %v279 = vpop.xlane.xlu0 %278
        %v280 = vadd.f32 %v232, %v233
        %281 = vadd.xlane.f32.xlu0 %v280
        %v282 = vpop.xlane.xlu0 %281
        %v299 = vperm.slane %v237, 0
        %v300 = vperm.slane %v237, 1
        %v301 = vperm.slane %v237, 2
        %v302 = vperm.slane %v237, 3
        %v303 = vperm.slane %v237, 4
        %v304 = vperm.slane %v237, 5
        %v305 = vperm.slane %v237, 6
        %v306 = vperm.slane %v237, 7
        %v307 = vperm.slane %v240, 0
        %v308 = vperm.slane %v240, 1
        %v309 = vperm.slane %v240, 2
        %v310 = vperm.slane %v240, 3
        %v311 = vperm.slane %v240, 4
        %v312 = vperm.slane %v240, 5
        %v313 = vperm.slane %v240, 6
        %v314 = vperm.slane %v240, 7
        %v315 = vperm.slane %v243, 0
        %v316 = vperm.slane %v243, 1
        %v317 = vperm.slane %v243, 2
        %v318 = vperm.slane %v243, 3
        %v319 = vperm.slane %v243, 4
        %v320 = vperm.slane %v243, 5
        %v321 = vperm.slane %v243, 6
        %v322 = vperm.slane %v243, 7
        %v323 = vperm.slane %v246, 0
        %v324 = vperm.slane %v246, 1
        %v325 = vperm.slane %v246, 2
        %v326 = vperm.slane %v246, 3
        %v327 = vperm.slane %v246, 4
        %v328 = vperm.slane %v246, 5
        %v329 = vperm.slane %v246, 6
        %v330 = vperm.slane %v246, 7
        %v331 = vperm.slane %v249, 0
        %v332 = vperm.slane %v249, 1
        %v333 = vperm.slane %v249, 2
        %v334 = vperm.slane %v249, 3
        %v335 = vperm.slane %v249, 4
        %v336 = vperm.slane %v249, 5
        %v337 = vperm.slane %v249, 6
        %v338 = vperm.slane %v249, 7
        %v339 = vperm.slane %v252, 0
        %v340 = vperm.slane %v252, 1
        %v341 = vperm.slane %v252, 2
        %v342 = vperm.slane %v252, 3
        %v343 = vperm.slane %v252, 4
        %v344 = vperm.slane %v252, 5
        %v345 = vperm.slane %v252, 6
        %v346 = vperm.slane %v252, 7
        %v347 = vperm.slane %v255, 0
        %v348 = vperm.slane %v255, 1
        %v349 = vperm.slane %v255, 2
        %v350 = vperm.slane %v255, 3
        %v351 = vperm.slane %v255, 4
        %v352 = vperm.slane %v255, 5
        %v353 = vperm.slane %v255, 6
        %v354 = vperm.slane %v255, 7
        %v355 = vperm.slane %v258, 0
        %v356 = vperm.slane %v258, 1
        %v357 = vperm.slane %v258, 2
        %v358 = vperm.slane %v258, 3
        %v359 = vperm.slane %v258, 4
        %v360 = vperm.slane %v258, 5
        %v361 = vperm.slane %v258, 6
        %v362 = vperm.slane %v258, 7
        %v363 = vperm.slane %v261, 0
        %v364 = vperm.slane %v261, 1
        %v365 = vperm.slane %v261, 2
        %v366 = vperm.slane %v261, 3
        %v367 = vperm.slane %v261, 4
        %v368 = vperm.slane %v261, 5
        %v369 = vperm.slane %v261, 6
        %v370 = vperm.slane %v261, 7
        %v371 = vperm.slane %v264, 0
        %v372 = vperm.slane %v264, 1
        %v373 = vperm.slane %v264, 2
        %v374 = vperm.slane %v264, 3
        %v375 = vperm.slane %v264, 4
        %v376 = vperm.slane %v264, 5
        %v377 = vperm.slane %v264, 6
        %v378 = vperm.slane %v264, 7
        %v379 = vperm.slane %v267, 0
        %v380 = vperm.slane %v267, 1
        %v381 = vperm.slane %v267, 2
        %v382 = vperm.slane %v267, 3
        %v383 = vperm.slane %v267, 4
        %v384 = vperm.slane %v267, 5
        %v385 = vperm.slane %v267, 6
        %v386 = vperm.slane %v267, 7
        %v387 = vperm.slane %v270, 0
        %v388 = vperm.slane %v270, 1
        %v389 = vperm.slane %v270, 2
        %v390 = vperm.slane %v270, 3
        %v391 = vperm.slane %v270, 4
        %v392 = vperm.slane %v270, 5
        %v393 = vperm.slane %v270, 6
        %v394 = vperm.slane %v270, 7
        %v395 = vperm.slane %v273, 0
        %v396 = vperm.slane %v273, 1
        %v397 = vperm.slane %v273, 2
        %v398 = vperm.slane %v273, 3
        %v399 = vperm.slane %v273, 4
        %v400 = vperm.slane %v273, 5
        %v401 = vperm.slane %v273, 6
        %v402 = vperm.slane %v273, 7
        %v403 = vperm.slane %v276, 0
        %v404 = vperm.slane %v276, 1
        %v405 = vperm.slane %v276, 2
        %v406 = vperm.slane %v276, 3
        %v407 = vperm.slane %v276, 4
        %v408 = vperm.slane %v276, 5
        %v409 = vperm.slane %v276, 6
        %v410 = vperm.slane %v276, 7
        %v411 = vperm.slane %v279, 0
        %v412 = vperm.slane %v279, 1
        %v413 = vperm.slane %v279, 2
        %v414 = vperm.slane %v279, 3
        %v415 = vperm.slane %v279, 4
        %v416 = vperm.slane %v279, 5
        %v417 = vperm.slane %v279, 6
        %v418 = vperm.slane %v279, 7
        %v419 = vperm.slane %v282, 0
        %v420 = vperm.slane %v282, 1
        %v421 = vperm.slane %v282, 2
        %v422 = vperm.slane %v282, 3
        %v423 = vperm.slane %v282, 4
        %v424 = vperm.slane %v282, 5
        %v425 = vperm.slane %v282, 6
        %v426 = vperm.slane %v282, 7
        %427 = vst [vmem:[#allocation1] ss:$9 sm:$0xff] %v299
        %s428 = scalar_lea.vmem [#allocation1], 1
        %429 = vst [vmem:[%s428] ss:$9 sm:$0xff] %v300
        %s430 = scalar_lea.vmem [#allocation1], 2
        %431 = vst [vmem:[%s430] ss:$9 sm:$0xff] %v301
        %s432 = scalar_lea.vmem [#allocation1], 3
        %433 = vst [vmem:[%s432] ss:$9 sm:$0xff] %v302
        %s434 = scalar_lea.vmem [#allocation1], 4
        %435 = vst [vmem:[%s434] ss:$9 sm:$0xff] %v303
        %s436 = scalar_lea.vmem [#allocation1], 5
        %437 = vst [vmem:[%s436] ss:$9 sm:$0xff] %v304
        %s438 = scalar_lea.vmem [#allocation1], 6
        %439 = vst [vmem:[%s438] ss:$9 sm:$0xff] %v305
        %s440 = scalar_lea.vmem [#allocation1], 7
        %441 = vst [vmem:[%s440] ss:$9 sm:$0xff] %v306
        %v442 = vld [vmem:[#allocation1] sm:$0xff]
        %443 = vst [vmem:[#allocation1] ss:$9 sm:$0xff] %v307
        %444 = vst [vmem:[%s428] ss:$9 sm:$0xff] %v308
        %445 = vst [vmem:[%s430] ss:$9 sm:$0xff] %v309
        %446 = vst [vmem:[%s432] ss:$9 sm:$0xff] %v310
        %447 = vst [vmem:[%s434] ss:$9 sm:$0xff] %v311
        %448 = vst [vmem:[%s436] ss:$9 sm:$0xff] %v312
        %449 = vst [vmem:[%s438] ss:$9 sm:$0xff] %v313
        %450 = vst [vmem:[%s440] ss:$9 sm:$0xff] %v314
        %v451 = vld [vmem:[#allocation1] sm:$0xff]
        %452 = vst [vmem:[#allocation1] ss:$9 sm:$0xff] %v315
        %453 = vst [vmem:[%s428] ss:$9 sm:$0xff] %v316
        %454 = vst [vmem:[%s430] ss:$9 sm:$0xff] %v317
        %455 = vst [vmem:[%s432] ss:$9 sm:$0xff] %v318
        %456 = vst [vmem:[%s434] ss:$9 sm:$0xff] %v319
        %457 = vst [vmem:[%s436] ss:$9 sm:$0xff] %v320
        %458 = vst [vmem:[%s438] ss:$9 sm:$0xff] %v321
        %459 = vst [vmem:[%s440] ss:$9 sm:$0xff] %v322
        %v460 = vld [vmem:[#allocation1] sm:$0xff]
        %461 = vst [vmem:[#allocation1] ss:$9 sm:$0xff] %v323
        %462 = vst [vmem:[%s428] ss:$9 sm:$0xff] %v324
        %463 = vst [vmem:[%s430] ss:$9 sm:$0xff] %v325
        %464 = vst [vmem:[%s432] ss:$9 sm:$0xff] %v326
        %465 = vst [vmem:[%s434] ss:$9 sm:$0xff] %v327
        %466 = vst [vmem:[%s436] ss:$9 sm:$0xff] %v328
        %467 = vst [vmem:[%s438] ss:$9 sm:$0xff] %v329
        %468 = vst [vmem:[%s440] ss:$9 sm:$0xff] %v330
        %v469 = vld [vmem:[#allocation1] sm:$0xff]
        %470 = vst [vmem:[#allocation1] ss:$9 sm:$0xff] %v331
        %471 = vst [vmem:[%s428] ss:$9 sm:$0xff] %v332
        %472 = vst [vmem:[%s430] ss:$9 sm:$0xff] %v333
        %473 = vst [vmem:[%s432] ss:$9 sm:$0xff] %v334
        %474 = vst [vmem:[%s434] ss:$9 sm:$0xff] %v335
        %475 = vst [vmem:[%s436] ss:$9 sm:$0xff] %v336
        %476 = vst [vmem:[%s438] ss:$9 sm:$0xff] %v337
        %477 = vst [vmem:[%s440] ss:$9 sm:$0xff] %v338
        %v478 = vld [vmem:[#allocation1] sm:$0xff]
        %479 = vst [vmem:[#allocation1] ss:$9 sm:$0xff] %v339
        %480 = vst [vmem:[%s428] ss:$9 sm:$0xff] %v340
        %481 = vst [vmem:[%s430] ss:$9 sm:$0xff] %v341
        %482 = vst [vmem:[%s432] ss:$9 sm:$0xff] %v342
        %483 = vst [vmem:[%s434] ss:$9 sm:$0xff] %v343
        %484 = vst [vmem:[%s436] ss:$9 sm:$0xff] %v344
        %485 = vst [vmem:[%s438] ss:$9 sm:$0xff] %v345
        %486 = vst [vmem:[%s440] ss:$9 sm:$0xff] %v346
        %v487 = vld [vmem:[#allocation1] sm:$0xff]
        %488 = vst [vmem:[#allocation1] ss:$9 sm:$0xff] %v347
        %489 = vst [vmem:[%s428] ss:$9 sm:$0xff] %v348
        %490 = vst [vmem:[%s430] ss:$9 sm:$0xff] %v349
        %491 = vst [vmem:[%s432] ss:$9 sm:$0xff] %v350
        %492 = vst [vmem:[%s434] ss:$9 sm:$0xff] %v351
        %493 = vst [vmem:[%s436] ss:$9 sm:$0xff] %v352
        %494 = vst [vmem:[%s438] ss:$9 sm:$0xff] %v353
        %495 = vst [vmem:[%s440] ss:$9 sm:$0xff] %v354
        %v496 = vld [vmem:[#allocation1] sm:$0xff]
        %497 = vst [vmem:[#allocation1] ss:$9 sm:$0xff] %v355
        %498 = vst [vmem:[%s428] ss:$9 sm:$0xff] %v356
        %499 = vst [vmem:[%s430] ss:$9 sm:$0xff] %v357
        %500 = vst [vmem:[%s432] ss:$9 sm:$0xff] %v358
        %501 = vst [vmem:[%s434] ss:$9 sm:$0xff] %v359
        %502 = vst [vmem:[%s436] ss:$9 sm:$0xff] %v360
        %503 = vst [vmem:[%s438] ss:$9 sm:$0xff] %v361
        %504 = vst [vmem:[%s440] ss:$9 sm:$0xff] %v362
        %v505 = vld [vmem:[#allocation1] sm:$0xff]
        %506 = vst [vmem:[#allocation1] ss:$9 sm:$0xff] %v363
        %507 = vst [vmem:[%s428] ss:$9 sm:$0xff] %v364
        %508 = vst [vmem:[%s430] ss:$9 sm:$0xff] %v365
        %509 = vst [vmem:[%s432] ss:$9 sm:$0xff] %v366
        %510 = vst [vmem:[%s434] ss:$9 sm:$0xff] %v367
        %511 = vst [vmem:[%s436] ss:$9 sm:$0xff] %v368
        %512 = vst [vmem:[%s438] ss:$9 sm:$0xff] %v369
        %513 = vst [vmem:[%s440] ss:$9 sm:$0xff] %v370
        %v514 = vld [vmem:[#allocation1] sm:$0xff]
        %515 = vst [vmem:[#allocation1] ss:$9 sm:$0xff] %v371
        %516 = vst [vmem:[%s428] ss:$9 sm:$0xff] %v372
        %517 = vst [vmem:[%s430] ss:$9 sm:$0xff] %v373
        %518 = vst [vmem:[%s432] ss:$9 sm:$0xff] %v374
        %519 = vst [vmem:[%s434] ss:$9 sm:$0xff] %v375
        %520 = vst [vmem:[%s436] ss:$9 sm:$0xff] %v376
        %521 = vst [vmem:[%s438] ss:$9 sm:$0xff] %v377
        %522 = vst [vmem:[%s440] ss:$9 sm:$0xff] %v378
        %v523 = vld [vmem:[#allocation1] sm:$0xff]
        %524 = vst [vmem:[#allocation1] ss:$9 sm:$0xff] %v379
        %525 = vst [vmem:[%s428] ss:$9 sm:$0xff] %v380
        %526 = vst [vmem:[%s430] ss:$9 sm:$0xff] %v381
        %527 = vst [vmem:[%s432] ss:$9 sm:$0xff] %v382
        %528 = vst [vmem:[%s434] ss:$9 sm:$0xff] %v383
        %529 = vst [vmem:[%s436] ss:$9 sm:$0xff] %v384
        %530 = vst [vmem:[%s438] ss:$9 sm:$0xff] %v385
        %531 = vst [vmem:[%s440] ss:$9 sm:$0xff] %v386
        %v532 = vld [vmem:[#allocation1] sm:$0xff]
        %533 = vst [vmem:[#allocation1] ss:$9 sm:$0xff] %v387
        %534 = vst [vmem:[%s428] ss:$9 sm:$0xff] %v388
        %535 = vst [vmem:[%s430] ss:$9 sm:$0xff] %v389
        %536 = vst [vmem:[%s432] ss:$9 sm:$0xff] %v390
        %537 = vst [vmem:[%s434] ss:$9 sm:$0xff] %v391
        %538 = vst [vmem:[%s436] ss:$9 sm:$0xff] %v392
        %539 = vst [vmem:[%s438] ss:$9 sm:$0xff] %v393
        %540 = vst [vmem:[%s440] ss:$9 sm:$0xff] %v394
        %v541 = vld [vmem:[#allocation1] sm:$0xff]
        %542 = vst [vmem:[#allocation1] ss:$9 sm:$0xff] %v395
        %543 = vst [vmem:[%s428] ss:$9 sm:$0xff] %v396
        %544 = vst [vmem:[%s430] ss:$9 sm:$0xff] %v397
        %545 = vst [vmem:[%s432] ss:$9 sm:$0xff] %v398
        %546 = vst [vmem:[%s434] ss:$9 sm:$0xff] %v399
        %547 = vst [vmem:[%s436] ss:$9 sm:$0xff] %v400
        %548 = vst [vmem:[%s438] ss:$9 sm:$0xff] %v401
        %549 = vst [vmem:[%s440] ss:$9 sm:$0xff] %v402
        %v550 = vld [vmem:[#allocation1] sm:$0xff]
        %551 = vst [vmem:[#allocation1] ss:$9 sm:$0xff] %v403
        %552 = vst [vmem:[%s428] ss:$9 sm:$0xff] %v404
        %553 = vst [vmem:[%s430] ss:$9 sm:$0xff] %v405
        %554 = vst [vmem:[%s432] ss:$9 sm:$0xff] %v406
        %555 = vst [vmem:[%s434] ss:$9 sm:$0xff] %v407
        %556 = vst [vmem:[%s436] ss:$9 sm:$0xff] %v408
        %557 = vst [vmem:[%s438] ss:$9 sm:$0xff] %v409
        %558 = vst [vmem:[%s440] ss:$9 sm:$0xff] %v410
        %v559 = vld [vmem:[#allocation1] sm:$0xff]
        %560 = vst [vmem:[#allocation1] ss:$9 sm:$0xff] %v411
        %561 = vst [vmem:[%s428] ss:$9 sm:$0xff] %v412
        %562 = vst [vmem:[%s430] ss:$9 sm:$0xff] %v413
        %563 = vst [vmem:[%s432] ss:$9 sm:$0xff] %v414
        %564 = vst [vmem:[%s434] ss:$9 sm:$0xff] %v415
        %565 = vst [vmem:[%s436] ss:$9 sm:$0xff] %v416
        %566 = vst [vmem:[%s438] ss:$9 sm:$0xff] %v417
        %567 = vst [vmem:[%s440] ss:$9 sm:$0xff] %v418
        %v568 = vld [vmem:[#allocation1] sm:$0xff]
        %569 = vst [vmem:[#allocation1] ss:$9 sm:$0xff] %v419
        %570 = vst [vmem:[%s428] ss:$9 sm:$0xff] %v420
        %571 = vst [vmem:[%s430] ss:$9 sm:$0xff] %v421
        %572 = vst [vmem:[%s432] ss:$9 sm:$0xff] %v422
        %573 = vst [vmem:[%s434] ss:$9 sm:$0xff] %v423
        %574 = vst [vmem:[%s436] ss:$9 sm:$0xff] %v424
        %575 = vst [vmem:[%s438] ss:$9 sm:$0xff] %v425
        %576 = vst [vmem:[%s440] ss:$9 sm:$0xff] %v426
        %v577 = vld [vmem:[#allocation1] sm:$0xff]
        %578 = vset.pattern.permute.xlu0 0
        %579 = vperm.xlu0 %578, %v442
        %v580 = vpop.permute.xlu0 %579
        %581 = vset.pattern.permute.xlu0 0
        %582 = vperm.xlu0 %581, %v451
        %v583 = vpop.permute.xlu0 %582
        %584 = vset.pattern.permute.xlu0 0
        %585 = vperm.xlu0 %584, %v460
        %v586 = vpop.permute.xlu0 %585
        %587 = vset.pattern.permute.xlu0 0
        %588 = vperm.xlu0 %587, %v469
        %v589 = vpop.permute.xlu0 %588
        %590 = vset.pattern.permute.xlu0 0
        %591 = vperm.xlu0 %590, %v478
        %v592 = vpop.permute.xlu0 %591
        %593 = vset.pattern.permute.xlu0 0
        %594 = vperm.xlu0 %593, %v487
        %v595 = vpop.permute.xlu0 %594
        %596 = vset.pattern.permute.xlu0 0
        %597 = vperm.xlu0 %596, %v496
        %v598 = vpop.permute.xlu0 %597
        %599 = vset.pattern.permute.xlu0 0
        %600 = vperm.xlu0 %599, %v505
        %v601 = vpop.permute.xlu0 %600
        %602 = vset.pattern.permute.xlu0 0
        %603 = vperm.xlu0 %602, %v514
        %v604 = vpop.permute.xlu0 %603
        %605 = vset.pattern.permute.xlu0 0
        %606 = vperm.xlu0 %605, %v523
        %v607 = vpop.permute.xlu0 %606
        %608 = vset.pattern.permute.xlu0 0
        %609 = vperm.xlu0 %608, %v532
        %v610 = vpop.permute.xlu0 %609
        %611 = vset.pattern.permute.xlu0 0
        %612 = vperm.xlu0 %611, %v541
        %v613 = vpop.permute.xlu0 %612
        %614 = vset.pattern.permute.xlu0 0
        %615 = vperm.xlu0 %614, %v550
        %v616 = vpop.permute.xlu0 %615
        %617 = vset.pattern.permute.xlu0 0
        %618 = vperm.xlu0 %617, %v559
        %v619 = vpop.permute.xlu0 %618
        %620 = vset.pattern.permute.xlu0 0
        %621 = vperm.xlu0 %620, %v568
        %v622 = vpop.permute.xlu0 %621
        %623 = vset.pattern.permute.xlu0 0
        %624 = vperm.xlu0 %623, %v577
        %v625 = vpop.permute.xlu0 %624
        %v626 = vlaneseq
        %v627 = vand.u32 %v626, 127
        %v628 = vperm.slane %v580, %v627
        %v629 = vadd.s32 %v627, 4294967288
        %v630 = vperm.slane %v583, %v629
        %vm631 = vcmask 130112
        %v632 = vsel %vm631, %v630, %v628
        %v633 = vadd.s32 %v627, 4294967280
        %v634 = vperm.slane %v586, %v633
        %vm635 = vcmask 195712
        %v636 = vsel %vm635, %v634, %v632
        %v637 = vadd.s32 %v627, 4294967272
        %v638 = vperm.slane %v589, %v637
        %vm639 = vcmask 261312
        %v640 = vsel %vm639, %v638, %v636
        %v641 = vadd.s32 %v627, 4294967264
        %v642 = vperm.slane %v592, %v641
        %vm643 = vcmask 326912
        %v644 = vsel %vm643, %v642, %v640
        %v645 = vadd.s32 %v627, 4294967256
        %v646 = vperm.slane %v595, %v645
        %vm647 = vcmask 392512
        %v648 = vsel %vm647, %v646, %v644
        %v649 = vadd.s32 %v627, 4294967248
        %v650 = vperm.slane %v598, %v649
        %vm651 = vcmask 458112
        %v652 = vsel %vm651, %v650, %v648
        %v653 = vadd.s32 %v627, 4294967240
        %v654 = vperm.slane %v601, %v653
        %vm655 = vcmask 523712
        %v656 = vsel %vm655, %v654, %v652
        %v657 = vadd.s32 %v627, 4294967232
        %v658 = vperm.slane %v604, %v657
        %vm659 = vcmask 589312
        %v660 = vsel %vm659, %v658, %v656
        %v661 = vadd.s32 %v627, 4294967224
        %v662 = vperm.slane %v607, %v661
        %vm663 = vcmask 654912
        %v664 = vsel %vm663, %v662, %v660
        %v665 = vadd.s32 %v627, 4294967216
        %v666 = vperm.slane %v610, %v665
        %vm667 = vcmask 720512
        %v668 = vsel %vm667, %v666, %v664
        %v669 = vadd.s32 %v627, 4294967208
        %v670 = vperm.slane %v613, %v669
        %vm671 = vcmask 786112
        %v672 = vsel %vm671, %v670, %v668
        %v673 = vadd.s32 %v627, 4294967200
        %v674 = vperm.slane %v616, %v673
        %vm675 = vcmask 851712
        %v676 = vsel %vm675, %v674, %v672
        %v677 = vadd.s32 %v627, 4294967192
        %v678 = vperm.slane %v619, %v677
        %vm679 = vcmask 917312
        %v680 = vsel %vm679, %v678, %v676
        %v681 = vadd.s32 %v627, 4294967184
        %v682 = vperm.slane %v622, %v681
        %vm683 = vcmask 982912
        %v684 = vsel %vm683, %v682, %v680
        %v685 = vadd.s32 %v627, 4294967176
        %v686 = vperm.slane %v625, %v685
        %vm687 = vcmask 1048512
        %v688 = vsel %vm687, %v686, %v684
        %v690 = vadd.f32 %v234, %v688
        %691 = vst [vmem:[#allocation2] sm:$0x1] %v690
        %v692 = vld [vmem:[#allocation3] sm:$0x1]
        %v693 = vmax.f32 %v202, %v203
        %694 = vmax.xlane.f32.xlu0 %v693
        %v695 = vpop.xlane.xlu0 %694
        %v696 = vmax.f32 %v204, %v205
        %697 = vmax.xlane.f32.xlu0 %v696
        %v698 = vpop.xlane.xlu0 %697
        %v699 = vmax.f32 %v206, %v207
        %700 = vmax.xlane.f32.xlu0 %v699
        %v701 = vpop.xlane.xlu0 %700
        %v702 = vmax.f32 %v208, %v209
        %703 = vmax.xlane.f32.xlu0 %v702
        %v704 = vpop.xlane.xlu0 %703
        %v705 = vmax.f32 %v210, %v211
        %706 = vmax.xlane.f32.xlu0 %v705
        %v707 = vpop.xlane.xlu0 %706
        %v708 = vmax.f32 %v212, %v213
        %709 = vmax.xlane.f32.xlu0 %v708
        %v710 = vpop.xlane.xlu0 %709
        %v711 = vmax.f32 %v214, %v215
        %712 = vmax.xlane.f32.xlu0 %v711
        %v713 = vpop.xlane.xlu0 %712
        %v714 = vmax.f32 %v216, %v217
        %715 = vmax.xlane.f32.xlu0 %v714
        %v716 = vpop.xlane.xlu0 %715
        %v717 = vmax.f32 %v218, %v219
        %718 = vmax.xlane.f32.xlu0 %v717
        %v719 = vpop.xlane.xlu0 %718
        %v720 = vmax.f32 %v220, %v221
        %721 = vmax.xlane.f32.xlu0 %v720
        %v722 = vpop.xlane.xlu0 %721
        %v723 = vmax.f32 %v222, %v223
        %724 = vmax.xlane.f32.xlu0 %v723
        %v725 = vpop.xlane.xlu0 %724
        %v726 = vmax.f32 %v224, %v225
        %727 = vmax.xlane.f32.xlu0 %v726
        %v728 = vpop.xlane.xlu0 %727
        %v729 = vmax.f32 %v226, %v227
        %730 = vmax.xlane.f32.xlu0 %v729
        %v731 = vpop.xlane.xlu0 %730
        %v732 = vmax.f32 %v228, %v229
        %733 = vmax.xlane.f32.xlu0 %v732
        %v734 = vpop.xlane.xlu0 %733
        %v735 = vmax.f32 %v230, %v231
        %736 = vmax.xlane.f32.xlu0 %v735
        %v737 = vpop.xlane.xlu0 %736
        %v738 = vmax.f32 %v232, %v233
        %739 = vmax.xlane.f32.xlu0 %v738
        %v740 = vpop.xlane.xlu0 %739
        %v757 = vperm.slane %v695, 0
        %v758 = vperm.slane %v695, 1
        %v759 = vperm.slane %v695, 2
        %v760 = vperm.slane %v695, 3
        %v761 = vperm.slane %v695, 4
        %v762 = vperm.slane %v695, 5
        %v763 = vperm.slane %v695, 6
        %v764 = vperm.slane %v695, 7
        %v765 = vperm.slane %v698, 0
        %v766 = vperm.slane %v698, 1
        %v767 = vperm.slane %v698, 2
        %v768 = vperm.slane %v698, 3
        %v769 = vperm.slane %v698, 4
        %v770 = vperm.slane %v698, 5
        %v771 = vperm.slane %v698, 6
        %v772 = vperm.slane %v698, 7
        %v773 = vperm.slane %v701, 0
        %v774 = vperm.slane %v701, 1
        %v775 = vperm.slane %v701, 2
        %v776 = vperm.slane %v701, 3
        %v777 = vperm.slane %v701, 4
        %v778 = vperm.slane %v701, 5
        %v779 = vperm.slane %v701, 6
        %v780 = vperm.slane %v701, 7
        %v781 = vperm.slane %v704, 0
        %v782 = vperm.slane %v704, 1
        %v783 = vperm.slane %v704, 2
        %v784 = vperm.slane %v704, 3
        %v785 = vperm.slane %v704, 4
        %v786 = vperm.slane %v704, 5
        %v787 = vperm.slane %v704, 6
        %v788 = vperm.slane %v704, 7
        %v789 = vperm.slane %v707, 0
        %v790 = vperm.slane %v707, 1
        %v791 = vperm.slane %v707, 2
        %v792 = vperm.slane %v707, 3
        %v793 = vperm.slane %v707, 4
        %v794 = vperm.slane %v707, 5
        %v795 = vperm.slane %v707, 6
        %v796 = vperm.slane %v707, 7
        %v797 = vperm.slane %v710, 0
        %v798 = vperm.slane %v710, 1
        %v799 = vperm.slane %v710, 2
        %v800 = vperm.slane %v710, 3
        %v801 = vperm.slane %v710, 4
        %v802 = vperm.slane %v710, 5
        %v803 = vperm.slane %v710, 6
        %v804 = vperm.slane %v710, 7
        %v805 = vperm.slane %v713, 0
        %v806 = vperm.slane %v713, 1
        %v807 = vperm.slane %v713, 2
        %v808 = vperm.slane %v713, 3
        %v809 = vperm.slane %v713, 4
        %v810 = vperm.slane %v713, 5
        %v811 = vperm.slane %v713, 6
        %v812 = vperm.slane %v713, 7
        %v813 = vperm.slane %v716, 0
        %v814 = vperm.slane %v716, 1
        %v815 = vperm.slane %v716, 2
        %v816 = vperm.slane %v716, 3
        %v817 = vperm.slane %v716, 4
        %v818 = vperm.slane %v716, 5
        %v819 = vperm.slane %v716, 6
        %v820 = vperm.slane %v716, 7
        %v821 = vperm.slane %v719, 0
        %v822 = vperm.slane %v719, 1
        %v823 = vperm.slane %v719, 2
        %v824 = vperm.slane %v719, 3
        %v825 = vperm.slane %v719, 4
        %v826 = vperm.slane %v719, 5
        %v827 = vperm.slane %v719, 6
        %v828 = vperm.slane %v719, 7
        %v829 = vperm.slane %v722, 0
        %v830 = vperm.slane %v722, 1
        %v831 = vperm.slane %v722, 2
        %v832 = vperm.slane %v722, 3
        %v833 = vperm.slane %v722, 4
        %v834 = vperm.slane %v722, 5
        %v835 = vperm.slane %v722, 6
        %v836 = vperm.slane %v722, 7
        %v837 = vperm.slane %v725, 0
        %v838 = vperm.slane %v725, 1
        %v839 = vperm.slane %v725, 2
        %v840 = vperm.slane %v725, 3
        %v841 = vperm.slane %v725, 4
        %v842 = vperm.slane %v725, 5
        %v843 = vperm.slane %v725, 6
        %v844 = vperm.slane %v725, 7
        %v845 = vperm.slane %v728, 0
        %v846 = vperm.slane %v728, 1
        %v847 = vperm.slane %v728, 2
        %v848 = vperm.slane %v728, 3
        %v849 = vperm.slane %v728, 4
        %v850 = vperm.slane %v728, 5
        %v851 = vperm.slane %v728, 6
        %v852 = vperm.slane %v728, 7
        %v853 = vperm.slane %v731, 0
        %v854 = vperm.slane %v731, 1
        %v855 = vperm.slane %v731, 2
        %v856 = vperm.slane %v731, 3
        %v857 = vperm.slane %v731, 4
        %v858 = vperm.slane %v731, 5
        %v859 = vperm.slane %v731, 6
        %v860 = vperm.slane %v731, 7
        %v861 = vperm.slane %v734, 0
        %v862 = vperm.slane %v734, 1
        %v863 = vperm.slane %v734, 2
        %v864 = vperm.slane %v734, 3
        %v865 = vperm.slane %v734, 4
        %v866 = vperm.slane %v734, 5
        %v867 = vperm.slane %v734, 6
        %v868 = vperm.slane %v734, 7
        %v869 = vperm.slane %v737, 0
        %v870 = vperm.slane %v737, 1
        %v871 = vperm.slane %v737, 2
        %v872 = vperm.slane %v737, 3
        %v873 = vperm.slane %v737, 4
        %v874 = vperm.slane %v737, 5
        %v875 = vperm.slane %v737, 6
        %v876 = vperm.slane %v737, 7
        %v877 = vperm.slane %v740, 0
        %v878 = vperm.slane %v740, 1
        %v879 = vperm.slane %v740, 2
        %v880 = vperm.slane %v740, 3
        %v881 = vperm.slane %v740, 4
        %v882 = vperm.slane %v740, 5
        %v883 = vperm.slane %v740, 6
        %v884 = vperm.slane %v740, 7
        %885 = vst [vmem:[#allocation1] ss:$9 sm:$0xff] %v757
        %s886 = scalar_lea.vmem [#allocation1], 1
        %887 = vst [vmem:[%s886] ss:$9 sm:$0xff] %v758
        %s888 = scalar_lea.vmem [#allocation1], 2
        %889 = vst [vmem:[%s888] ss:$9 sm:$0xff] %v759
        %s890 = scalar_lea.vmem [#allocation1], 3
        %891 = vst [vmem:[%s890] ss:$9 sm:$0xff] %v760
        %s892 = scalar_lea.vmem [#allocation1], 4
        %893 = vst [vmem:[%s892] ss:$9 sm:$0xff] %v761
        %s894 = scalar_lea.vmem [#allocation1], 5
        %895 = vst [vmem:[%s894] ss:$9 sm:$0xff] %v762
        %s896 = scalar_lea.vmem [#allocation1], 6
        %897 = vst [vmem:[%s896] ss:$9 sm:$0xff] %v763
        %s898 = scalar_lea.vmem [#allocation1], 7
        %899 = vst [vmem:[%s898] ss:$9 sm:$0xff] %v764
        %v900 = vld [vmem:[#allocation1] sm:$0xff]
        %901 = vst [vmem:[#allocation1] ss:$9 sm:$0xff] %v765
        %902 = vst [vmem:[%s886] ss:$9 sm:$0xff] %v766
        %903 = vst [vmem:[%s888] ss:$9 sm:$0xff] %v767
        %904 = vst [vmem:[%s890] ss:$9 sm:$0xff] %v768
        %905 = vst [vmem:[%s892] ss:$9 sm:$0xff] %v769
        %906 = vst [vmem:[%s894] ss:$9 sm:$0xff] %v770
        %907 = vst [vmem:[%s896] ss:$9 sm:$0xff] %v771
        %908 = vst [vmem:[%s898] ss:$9 sm:$0xff] %v772
        %v909 = vld [vmem:[#allocation1] sm:$0xff]
        %910 = vst [vmem:[#allocation1] ss:$9 sm:$0xff] %v773
        %911 = vst [vmem:[%s886] ss:$9 sm:$0xff] %v774
        %912 = vst [vmem:[%s888] ss:$9 sm:$0xff] %v775
        %913 = vst [vmem:[%s890] ss:$9 sm:$0xff] %v776
        %914 = vst [vmem:[%s892] ss:$9 sm:$0xff] %v777
        %915 = vst [vmem:[%s894] ss:$9 sm:$0xff] %v778
        %916 = vst [vmem:[%s896] ss:$9 sm:$0xff] %v779
        %917 = vst [vmem:[%s898] ss:$9 sm:$0xff] %v780
        %v918 = vld [vmem:[#allocation1] sm:$0xff]
        %919 = vst [vmem:[#allocation1] ss:$9 sm:$0xff] %v781
        %920 = vst [vmem:[%s886] ss:$9 sm:$0xff] %v782
        %921 = vst [vmem:[%s888] ss:$9 sm:$0xff] %v783
        %922 = vst [vmem:[%s890] ss:$9 sm:$0xff] %v784
        %923 = vst [vmem:[%s892] ss:$9 sm:$0xff] %v785
        %924 = vst [vmem:[%s894] ss:$9 sm:$0xff] %v786
        %925 = vst [vmem:[%s896] ss:$9 sm:$0xff] %v787
        %926 = vst [vmem:[%s898] ss:$9 sm:$0xff] %v788
        %v927 = vld [vmem:[#allocation1] sm:$0xff]
        %928 = vst [vmem:[#allocation1] ss:$9 sm:$0xff] %v789
        %929 = vst [vmem:[%s886] ss:$9 sm:$0xff] %v790
        %930 = vst [vmem:[%s888] ss:$9 sm:$0xff] %v791
        %931 = vst [vmem:[%s890] ss:$9 sm:$0xff] %v792
        %932 = vst [vmem:[%s892] ss:$9 sm:$0xff] %v793
        %933 = vst [vmem:[%s894] ss:$9 sm:$0xff] %v794
        %934 = vst [vmem:[%s896] ss:$9 sm:$0xff] %v795
        %935 = vst [vmem:[%s898] ss:$9 sm:$0xff] %v796
        %v936 = vld [vmem:[#allocation1] sm:$0xff]
        %937 = vst [vmem:[#allocation1] ss:$9 sm:$0xff] %v797
        %938 = vst [vmem:[%s886] ss:$9 sm:$0xff] %v798
        %939 = vst [vmem:[%s888] ss:$9 sm:$0xff] %v799
        %940 = vst [vmem:[%s890] ss:$9 sm:$0xff] %v800
        %941 = vst [vmem:[%s892] ss:$9 sm:$0xff] %v801
        %942 = vst [vmem:[%s894] ss:$9 sm:$0xff] %v802
        %943 = vst [vmem:[%s896] ss:$9 sm:$0xff] %v803
        %944 = vst [vmem:[%s898] ss:$9 sm:$0xff] %v804
        %v945 = vld [vmem:[#allocation1] sm:$0xff]
        %946 = vst [vmem:[#allocation1] ss:$9 sm:$0xff] %v805
        %947 = vst [vmem:[%s886] ss:$9 sm:$0xff] %v806
        %948 = vst [vmem:[%s888] ss:$9 sm:$0xff] %v807
        %949 = vst [vmem:[%s890] ss:$9 sm:$0xff] %v808
        %950 = vst [vmem:[%s892] ss:$9 sm:$0xff] %v809
        %951 = vst [vmem:[%s894] ss:$9 sm:$0xff] %v810
        %952 = vst [vmem:[%s896] ss:$9 sm:$0xff] %v811
        %953 = vst [vmem:[%s898] ss:$9 sm:$0xff] %v812
        %v954 = vld [vmem:[#allocation1] sm:$0xff]
        %955 = vst [vmem:[#allocation1] ss:$9 sm:$0xff] %v813
        %956 = vst [vmem:[%s886] ss:$9 sm:$0xff] %v814
        %957 = vst [vmem:[%s888] ss:$9 sm:$0xff] %v815
        %958 = vst [vmem:[%s890] ss:$9 sm:$0xff] %v816
        %959 = vst [vmem:[%s892] ss:$9 sm:$0xff] %v817
        %960 = vst [vmem:[%s894] ss:$9 sm:$0xff] %v818
        %961 = vst [vmem:[%s896] ss:$9 sm:$0xff] %v819
        %962 = vst [vmem:[%s898] ss:$9 sm:$0xff] %v820
        %v963 = vld [vmem:[#allocation1] sm:$0xff]
        %964 = vst [vmem:[#allocation1] ss:$9 sm:$0xff] %v821
        %965 = vst [vmem:[%s886] ss:$9 sm:$0xff] %v822
        %966 = vst [vmem:[%s888] ss:$9 sm:$0xff] %v823
        %967 = vst [vmem:[%s890] ss:$9 sm:$0xff] %v824
        %968 = vst [vmem:[%s892] ss:$9 sm:$0xff] %v825
        %969 = vst [vmem:[%s894] ss:$9 sm:$0xff] %v826
        %970 = vst [vmem:[%s896] ss:$9 sm:$0xff] %v827
        %971 = vst [vmem:[%s898] ss:$9 sm:$0xff] %v828
        %v972 = vld [vmem:[#allocation1] sm:$0xff]
        %973 = vst [vmem:[#allocation1] ss:$9 sm:$0xff] %v829
        %974 = vst [vmem:[%s886] ss:$9 sm:$0xff] %v830
        %975 = vst [vmem:[%s888] ss:$9 sm:$0xff] %v831
        %976 = vst [vmem:[%s890] ss:$9 sm:$0xff] %v832
        %977 = vst [vmem:[%s892] ss:$9 sm:$0xff] %v833
        %978 = vst [vmem:[%s894] ss:$9 sm:$0xff] %v834
        %979 = vst [vmem:[%s896] ss:$9 sm:$0xff] %v835
        %980 = vst [vmem:[%s898] ss:$9 sm:$0xff] %v836
        %v981 = vld [vmem:[#allocation1] sm:$0xff]
        %982 = vst [vmem:[#allocation1] ss:$9 sm:$0xff] %v837
        %983 = vst [vmem:[%s886] ss:$9 sm:$0xff] %v838
        %984 = vst [vmem:[%s888] ss:$9 sm:$0xff] %v839
        %985 = vst [vmem:[%s890] ss:$9 sm:$0xff] %v840
        %986 = vst [vmem:[%s892] ss:$9 sm:$0xff] %v841
        %987 = vst [vmem:[%s894] ss:$9 sm:$0xff] %v842
        %988 = vst [vmem:[%s896] ss:$9 sm:$0xff] %v843
        %989 = vst [vmem:[%s898] ss:$9 sm:$0xff] %v844
        %v990 = vld [vmem:[#allocation1] sm:$0xff]
        %991 = vst [vmem:[#allocation1] ss:$9 sm:$0xff] %v845
        %992 = vst [vmem:[%s886] ss:$9 sm:$0xff] %v846
        %993 = vst [vmem:[%s888] ss:$9 sm:$0xff] %v847
        %994 = vst [vmem:[%s890] ss:$9 sm:$0xff] %v848
        %995 = vst [vmem:[%s892] ss:$9 sm:$0xff] %v849
        %996 = vst [vmem:[%s894] ss:$9 sm:$0xff] %v850
        %997 = vst [vmem:[%s896] ss:$9 sm:$0xff] %v851
        %998 = vst [vmem:[%s898] ss:$9 sm:$0xff] %v852
        %v999 = vld [vmem:[#allocation1] sm:$0xff]
        %1000 = vst [vmem:[#allocation1] ss:$9 sm:$0xff] %v853
        %1001 = vst [vmem:[%s886] ss:$9 sm:$0xff] %v854
        %1002 = vst [vmem:[%s888] ss:$9 sm:$0xff] %v855
        %1003 = vst [vmem:[%s890] ss:$9 sm:$0xff] %v856
        %1004 = vst [vmem:[%s892] ss:$9 sm:$0xff] %v857
        %1005 = vst [vmem:[%s894] ss:$9 sm:$0xff] %v858
        %1006 = vst [vmem:[%s896] ss:$9 sm:$0xff] %v859
        %1007 = vst [vmem:[%s898] ss:$9 sm:$0xff] %v860
        %v1008 = vld [vmem:[#allocation1] sm:$0xff]
        %1009 = vst [vmem:[#allocation1] ss:$9 sm:$0xff] %v861
        %1010 = vst [vmem:[%s886] ss:$9 sm:$0xff] %v862
        %1011 = vst [vmem:[%s888] ss:$9 sm:$0xff] %v863
        %1012 = vst [vmem:[%s890] ss:$9 sm:$0xff] %v864
        %1013 = vst [vmem:[%s892] ss:$9 sm:$0xff] %v865
        %1014 = vst [vmem:[%s894] ss:$9 sm:$0xff] %v866
        %1015 = vst [vmem:[%s896] ss:$9 sm:$0xff] %v867
        %1016 = vst [vmem:[%s898] ss:$9 sm:$0xff] %v868
        %v1017 = vld [vmem:[#allocation1] sm:$0xff]
        %1018 = vst [vmem:[#allocation1] ss:$9 sm:$0xff] %v869
        %1019 = vst [vmem:[%s886] ss:$9 sm:$0xff] %v870
        %1020 = vst [vmem:[%s888] ss:$9 sm:$0xff] %v871
        %1021 = vst [vmem:[%s890] ss:$9 sm:$0xff] %v872
        %1022 = vst [vmem:[%s892] ss:$9 sm:$0xff] %v873
        %1023 = vst [vmem:[%s894] ss:$9 sm:$0xff] %v874
        %1024 = vst [vmem:[%s896] ss:$9 sm:$0xff] %v875
        %1025 = vst [vmem:[%s898] ss:$9 sm:$0xff] %v876
        %v1026 = vld [vmem:[#allocation1] sm:$0xff]
        %1027 = vst [vmem:[#allocation1] ss:$9 sm:$0xff] %v877
        %1028 = vst [vmem:[%s886] ss:$9 sm:$0xff] %v878
        %1029 = vst [vmem:[%s888] ss:$9 sm:$0xff] %v879
        %1030 = vst [vmem:[%s890] ss:$9 sm:$0xff] %v880
        %1031 = vst [vmem:[%s892] ss:$9 sm:$0xff] %v881
        %1032 = vst [vmem:[%s894] ss:$9 sm:$0xff] %v882
        %1033 = vst [vmem:[%s896] ss:$9 sm:$0xff] %v883
        %1034 = vst [vmem:[%s898] ss:$9 sm:$0xff] %v884
        %v1035 = vld [vmem:[#allocation1] sm:$0xff]
        %1036 = vset.pattern.permute.xlu0 0
        %1037 = vperm.xlu0 %1036, %v900
        %v1038 = vpop.permute.xlu0 %1037
        %1039 = vset.pattern.permute.xlu0 0
        %1040 = vperm.xlu0 %1039, %v909
        %v1041 = vpop.permute.xlu0 %1040
        %1042 = vset.pattern.permute.xlu0 0
        %1043 = vperm.xlu0 %1042, %v918
        %v1044 = vpop.permute.xlu0 %1043
        %1045 = vset.pattern.permute.xlu0 0
        %1046 = vperm.xlu0 %1045, %v927
        %v1047 = vpop.permute.xlu0 %1046
        %1048 = vset.pattern.permute.xlu0 0
        %1049 = vperm.xlu0 %1048, %v936
        %v1050 = vpop.permute.xlu0 %1049
        %1051 = vset.pattern.permute.xlu0 0
        %1052 = vperm.xlu0 %1051, %v945
        %v1053 = vpop.permute.xlu0 %1052
        %1054 = vset.pattern.permute.xlu0 0
        %1055 = vperm.xlu0 %1054, %v954
        %v1056 = vpop.permute.xlu0 %1055
        %1057 = vset.pattern.permute.xlu0 0
        %1058 = vperm.xlu0 %1057, %v963
        %v1059 = vpop.permute.xlu0 %1058
        %1060 = vset.pattern.permute.xlu0 0
        %1061 = vperm.xlu0 %1060, %v972
        %v1062 = vpop.permute.xlu0 %1061
        %1063 = vset.pattern.permute.xlu0 0
        %1064 = vperm.xlu0 %1063, %v981
        %v1065 = vpop.permute.xlu0 %1064
        %1066 = vset.pattern.permute.xlu0 0
        %1067 = vperm.xlu0 %1066, %v990
        %v1068 = vpop.permute.xlu0 %1067
        %1069 = vset.pattern.permute.xlu0 0
        %1070 = vperm.xlu0 %1069, %v999
        %v1071 = vpop.permute.xlu0 %1070
        %1072 = vset.pattern.permute.xlu0 0
        %1073 = vperm.xlu0 %1072, %v1008
        %v1074 = vpop.permute.xlu0 %1073
        %1075 = vset.pattern.permute.xlu0 0
        %1076 = vperm.xlu0 %1075, %v1017
        %v1077 = vpop.permute.xlu0 %1076
        %1078 = vset.pattern.permute.xlu0 0
        %1079 = vperm.xlu0 %1078, %v1026
        %v1080 = vpop.permute.xlu0 %1079
        %1081 = vset.pattern.permute.xlu0 0
        %1082 = vperm.xlu0 %1081, %v1035
        %v1083 = vpop.permute.xlu0 %1082
        %v1084 = vperm.slane %v1038, %v627
        %v1085 = vperm.slane %v1041, %v629
        %v1086 = vsel %vm631, %v1085, %v1084
        %v1087 = vperm.slane %v1044, %v633
        %v1088 = vsel %vm635, %v1087, %v1086
        %v1089 = vperm.slane %v1047, %v637
        %v1090 = vsel %vm639, %v1089, %v1088
        %v1091 = vperm.slane %v1050, %v641
        %v1092 = vsel %vm643, %v1091, %v1090
        %v1093 = vperm.slane %v1053, %v645
        %v1094 = vsel %vm647, %v1093, %v1092
        %v1095 = vperm.slane %v1056, %v649
        %v1096 = vsel %vm651, %v1095, %v1094
        %v1097 = vperm.slane %v1059, %v653
        %v1098 = vsel %vm655, %v1097, %v1096
        %v1099 = vperm.slane %v1062, %v657
        %v1100 = vsel %vm659, %v1099, %v1098
        %v1101 = vperm.slane %v1065, %v661
        %v1102 = vsel %vm663, %v1101, %v1100
        %v1103 = vperm.slane %v1068, %v665
        %v1104 = vsel %vm667, %v1103, %v1102
        %v1105 = vperm.slane %v1071, %v669
        %v1106 = vsel %vm671, %v1105, %v1104
        %v1107 = vperm.slane %v1074, %v673
        %v1108 = vsel %vm675, %v1107, %v1106
        %v1109 = vperm.slane %v1077, %v677
        %v1110 = vsel %vm679, %v1109, %v1108
        %v1111 = vperm.slane %v1080, %v681
        %v1112 = vsel %vm683, %v1111, %v1110
        %v1113 = vperm.slane %v1083, %v685
        %v1114 = vsel %vm687, %v1113, %v1112
        %v1116 = vmax.f32 %v692, %v1114
        %1117 = vst [vmem:[#allocation3] sm:$0x1] %v1116
        // Predicated region
        $region37: #{channel_attention.1} parent=31 // pred_check
          %p1118 = pneg %p196
        $region38: #{channel_attention.1} parent=31 // pred_check_branch
          %1120 = sbr.rel (%p1118) target = $region40
        $region39: #{channel_attention.1} parent=31 // pred_region
          %v1121 = vld [vmem:[#allocation2] sm:$0x1]
          %v1122 = vmul.f32 %v1121, 0.00390625
          %v1123 = vld [vmem:[#allocation3] sm:$0x1]
          %v1124 = vld [vmem:[%s1] sm:$0xff]
          %v1125 = vld [vmem:[%s1 + $0x8] sm:$0xff]
          %v1126 = vld [vmem:[%s1 + $0x10] sm:$0xff]
          %v1127 = vld [vmem:[%s1 + $0x18] sm:$0xff]
          %v1128 = vld [vmem:[%s1 + $0x20] sm:$0xff]
          %v1129 = vld [vmem:[%s1 + $0x28] sm:$0xff]
          %v1130 = vld [vmem:[%s1 + $0x30] sm:$0xff]
          %v1131 = vld [vmem:[%s1 + $0x38] sm:$0xff]
          %v1132 = vld [vmem:[%s1 + $0x40] sm:$0xff]
          %v1133 = vld [vmem:[%s1 + $0x48] sm:$0xff]
          %v1134 = vld [vmem:[%s1 + $0x50] sm:$0xff]
          %v1135 = vld [vmem:[%s1 + $0x58] sm:$0xff]
          %v1136 = vld [vmem:[%s1 + $0x60] sm:$0xff]
          %v1137 = vld [vmem:[%s1 + $0x68] sm:$0xff]
          %v1138 = vld [vmem:[%s1 + $0x70] sm:$0xff]
          %v1139 = vld [vmem:[%s1 + $0x78] sm:$0xff]
          %v1140 = vld [vmem:[%s2] sm:$0xff]
          %1141 = vmatpush.msra.mxu0 %v1139
          %1142 = vmatpush.msra.mxu0 %v1138
          %1143 = vmatpush.msra.mxu0 %v1137
          %1144 = vmatpush.msra.mxu0 %v1136
          %1145 = vmatpush.msra.mxu0 %v1135
          %1146 = vmatpush.msra.mxu0 %v1134
          %1147 = vmatpush.msra.mxu0 %v1133
          %1148 = vmatpush.msra.mxu0 %v1132
          %1149 = vmatpush.msra.mxu0 %v1131
          %1150 = vmatpush.msra.mxu0 %v1130
          %1151 = vmatpush.msra.mxu0 %v1129
          %1152 = vmatpush.msra.mxu0 %v1128
          %1153 = vmatpush.msra.mxu0 %v1127
          %1154 = vmatpush.msra.mxu0 %v1126
          %1155 = vmatpush.msra.mxu0 %v1125
          %1156 = vmatpush.msra.mxu0 %v1124
          %1157 = vmatmul.f32.gmra.mxu0 %v1122
          %v1158 = vpop.f32.mrf.mxu0
          %v1159 = vadd.f32 0.0, %v1158
          %1160 = vdwg.mxu0
          %v1161 = vmax.f32 %v1159, 0.0
          %1162 = vmatpush.msra.mxu0 %v1139
          %1163 = vmatpush.msra.mxu0 %v1138
          %1164 = vmatpush.msra.mxu0 %v1137
          %1165 = vmatpush.msra.mxu0 %v1136
          %1166 = vmatpush.msra.mxu0 %v1135
          %1167 = vmatpush.msra.mxu0 %v1134
          %1168 = vmatpush.msra.mxu0 %v1133
          %1169 = vmatpush.msra.mxu0 %v1132
          %1170 = vmatpush.msra.mxu0 %v1131
          %1171 = vmatpush.msra.mxu0 %v1130
          %1172 = vmatpush.msra.mxu0 %v1129
          %1173 = vmatpush.msra.mxu0 %v1128
          %1174 = vmatpush.msra.mxu0 %v1127
          %1175 = vmatpush.msra.mxu0 %v1126
          %1176 = vmatpush.msra.mxu0 %v1125
          %1177 = vmatpush.msra.mxu0 %v1124
          %1178 = vmatmul.f32.gmra.mxu0 %v1123
          %v1179 = vpop.f32.mrf.mxu0
          %v1180 = vadd.f32 0.0, %v1179
          %1181 = vdwg.mxu0
          %v1182 = vmax.f32 %v1180, 0.0
          %vm1183 = vcmask 64512
          %v1185 = vsel %vm1183, %v1182, 0
          %1187 = vmatpush.msra.mxu0 0.0
          %1188 = vmatpush.msra.mxu0 0.0
          %1189 = vmatpush.msra.mxu0 0.0
          %1190 = vmatpush.msra.mxu0 0.0
          %1191 = vmatpush.msra.mxu0 0.0
          %1192 = vmatpush.msra.mxu0 0.0
          %1193 = vmatpush.msra.mxu0 0.0
          %1194 = vmatpush.msra.mxu0 0.0
          %1195 = vmatpush.msra.mxu0 0.0
          %1196 = vmatpush.msra.mxu0 0.0
          %1197 = vmatpush.msra.mxu0 0.0
          %1198 = vmatpush.msra.mxu0 0.0
          %1199 = vmatpush.msra.mxu0 0.0
          %1200 = vmatpush.msra.mxu0 0.0
          %1201 = vmatpush.msra.mxu0 0.0
          %1202 = vmatpush.msra.mxu0 %v1140
          %1203 = vmatmul.f32.gmra.mxu0 %v1185
          %v1204 = vpop.f32.mrf.mxu0
          %v1205 = vadd.f32 0.0, %v1204
          %1206 = vdwg.mxu0
          %v1208 = vsel %vm1183, %v1161, 0
          %1210 = vmatpush.msra.mxu0 0.0
          %1211 = vmatpush.msra.mxu0 0.0
          %1212 = vmatpush.msra.mxu0 0.0
          %1213 = vmatpush.msra.mxu0 0.0
          %1214 = vmatpush.msra.mxu0 0.0
          %1215 = vmatpush.msra.mxu0 0.0
          %1216 = vmatpush.msra.mxu0 0.0
          %1217 = vmatpush.msra.mxu0 0.0
          %1218 = vmatpush.msra.mxu0 0.0
          %1219 = vmatpush.msra.mxu0 0.0
          %1220 = vmatpush.msra.mxu0 0.0
          %1221 = vmatpush.msra.mxu0 0.0
          %1222 = vmatpush.msra.mxu0 0.0
          %1223 = vmatpush.msra.mxu0 0.0
          %1224 = vmatpush.msra.mxu0 0.0
          %1225 = vmatpush.msra.mxu0 %v1140
          %1226 = vmatmul.f32.gmra.mxu0 %v1208
          %v1227 = vpop.f32.mrf.mxu0
          %v1228 = vadd.f32 %v1205, %v1227
          %1229 = vdwg.mxu0
          %v1230 = vxor.u32 %v1228, 2147483648
          %v1231 = vmul.f32 %v1230, 1.442695
          %v1232 = vpow.pop %v1231
          %v1233 = vadd.f32 %v1232, 1.0
          %v1234 = vrcp.pop %v1233
          %v1235 = vmul.f32 %v1233, %v1234
          %v1236 = vsub.f32 1.0, %v1235
          %v1237 = vmul.f32 %v1234, %v1236
          %v1238 = vadd.f32 %v1234, %v1237
          %vm1239 = vweird.f32 %v1233
          %vm1240 = vweird.f32 %v1234
          %vm1241 = vmor %vm1239, %vm1240
          %v1242 = vsel %vm1241, %v1234, %v1238
          %v1243 = vand.u32 2147483647, %v1233
          %vm1244 = vcmp.eq.f32.partialorder %v1243, 8.507059e+37
          %v1245 = vand.u32 %v1233, 2147483648
          %v1246 = vor.u32 1.1754944e-38, %v1245
          %v1247 = vsel %vm1244, %v1246, %v1242
          %v1248 = vmul.f32 1.0, %v1247
          %1249 = vst [vmem:[%s185] sm:$0x1] %v1248
        $region40: #{channel_attention.1} parent=31 // pred_fallthru
          _
        %s1250 = sand.u32 %s107, 1
        %s1251 = scalar_lea.sflag [#allocation5], %s1250
        %s1252 = sand.u32 %s107, 1
        %s1253 = scalar_lea.vmem [#allocation4], %s1252
        // Predicated region
        $region41: #{channel_attention.1} parent=31 // pred_check
          %p1254 = pneg %p117
        $region42: #{channel_attention.1} parent=31 // pred_check_branch
          %1256 = sbr.rel (%p1254) target = $region44
        $region43: #{channel_attention.1} parent=31 // pred_region
          %1258 = vsyncadd %s1251, 0
          %s1259 = scalar_lea.hbm %s3, %s21
          %s1261 = sshll.u32 %s1253, 4
          %s1262 = int_to_ptr.vmem [resolvable:$true] %s1261
          %s1263 = sshll.u32 %s1259, 4
          %s1264 = int_to_ptr.hbm [resolvable:$true] %s1263
          %1266 = dma.vmem_to_hbm [thread:$0]  %s1262, 16, %s1264, %s1251
        $region44: #{channel_attention.1} parent=31 // pred_fallthru
          _
      $region32: #{channel_attention.1} parent=5 // pred_fallthru
        _
      %p1267 = scmp.le.s32.totalorder 2, %s12
      // Predicated region
      $region45: #{channel_attention.1} parent=5 // pred_check
        %p1268 = pneg %p1267
      $region46: #{channel_attention.1} parent=5 // pred_check_branch
        %1270 = sbr.rel (%p1268) target = $region48
      $region47: #{channel_attention.1} parent=5 // pred_region
        %s1271 = ssub.s32 %s12, 2
        // Predicated region
        $region49: #{channel_attention.1} parent=47 // pred_check
          %p1272 = pneg %p123
        $region50: #{channel_attention.1} parent=47 // pred_check_branch
          %1274 = sbr.rel (%p1272) target = $region52
        $region51: #{channel_attention.1} parent=47 // pred_region
          %s1275 = sand.u32 %s108, 1
          %s1276 = scalar_lea.sflag [#allocation5], %s1275
          %s1277 = sand.u32 %s108, 1
          %s1278 = scalar_lea.vmem [#allocation4], %s1277
          %1280 = dma.done %s1276, 16
        $region52: #{channel_attention.1} parent=47 // pred_fallthru
          _
      $region48: #{channel_attention.1} parent=5 // pred_fallthru
        _
    $region6: #{channel_attention.1} parent=1 // loop_footer
      %s16 = sadd.s32 1, %s12
    $region7: #{channel_attention.1} parent=1 // loop_footer_branch
      %11 = sbr.rel target = $region3
    $region8: #{channel_attention.1} parent=1 // loop_exit
      _
    %1281 = vsyncpa [#allocation5], 1
    %s1282 = scalar_lea.sflag [#allocation5], 1
    %1283 = vsyncpa %s1282, 1

</llo_original>
